<compile_context>
chip_gen: v6e
topology: v6e:2x2x1
jax: 0.10.0
libtpu: 0.0.40
codegen_flags: <defaults>
</compile_context>

<pallas_src>
import functools
import math

import jax
import jax.numpy as jnp
import numpy as np
from jax.experimental import pallas as pl
from jax.experimental.pallas import tpu as pltpu


# ------------------------------ Pallas kernel ------------------------------

def _patch_embed_kernel(x_ref, w_ref, t_ref, o_ref, *, rows_per_batch):
    # x_ref: (TM, P)   patch rows for this grid step (TM = rows per step, multiple of N)
    # w_ref: (P,  Dp)  projection weight stored (in, out); D padded to a 128-lane multiple
    # t_ref: (N,  Dp)  f32 additive table = bias + PE   (or (TM, Dp) in the fallback path)
    # o_ref: (TM, Dp)
    y = jnp.dot(x_ref[...], w_ref[...], preferred_element_type=jnp.float32)  # f32 accumulate
    t = t_ref[...]
    if rows_per_batch is None:
        y = y + t                                    # table pre-tiled to (TM, Dp)
    else:
        tm, d = y.shape
        # Free leading-dim reshape (rows_per_batch % 8 == 0): broadcast the (N, Dp) table
        # over the TM // N batch rows of this block without tiling it through HBM/VMEM.
        y = (y.reshape(tm // rows_per_batch, rows_per_batch, d) + t[None, :, :]).reshape(tm, d)
    o_ref[...] = y.astype(o_ref.dtype)


# ------------------------------ helpers ------------------------------------

def _round_up(x, m):
    return ((x + m - 1) // m) * m


def _choose_tm(total_rows, row_align, x_row_bytes, out_row_bytes, acc_row_bytes,
               target_out_block_bytes, vmem_budget_bytes):
    """Rows per grid step: ~target_out_block_bytes of output per step, VMEM-capped,
    multiple of row_align (= lcm(N, sublane)), and >= 2 grid steps when possible."""
    per_row = 2 * x_row_bytes + 2 * out_row_bytes + acc_row_bytes   # dbl-buffered in/out + f32 acc
    tm_vmem = max(row_align, vmem_budget_bytes // per_row)
    tm_tgt = max(row_align, target_out_block_bytes // max(out_row_bytes, 1))
    tm = min(tm_vmem, tm_tgt, total_rows)
    tm = max(row_align, (tm // row_align) * row_align)
    # Keep >= 2 grid steps when the problem allows (feed both v7x TensorCores).
    if -(-total_rows // tm) < 2 and total_rows >= 2 * row_align:
        tm = max(row_align, ((total_rows // 2) // row_align) * row_align)
    return tm


def sinusoidal_pe(max_len, d_model, theta=10000.0):
    """PositionalEmbedding(d_model, theta): standard sin/cos table (d_model even)."""
    position = jnp.arange(max_len, dtype=jnp.float32)[:, None]
    div_term = jnp.exp(
        jnp.arange(0, d_model, 2, dtype=jnp.float32) * -(math.log(theta) / d_model))
    pe = jnp.zeros((max_len, d_model), jnp.float32)
    pe = pe.at[:, 0::2].set(jnp.sin(position * div_term))
    pe = pe.at[:, 1::2].set(jnp.cos(position * div_term))
    return pe


def init_patch_embed(key, patch_len, dim, max_len):
    # nn.Linear default init: U(-1/sqrt(in), 1/sqrt(in)); weight kept as (in, out).
    kw, kb = jax.random.split(key)
    bound = 1.0 / math.sqrt(patch_len)
    w = jax.random.uniform(kw, (patch_len, dim), jnp.float32, -bound, bound)
    b = jax.random.uniform(kb, (dim,), jnp.float32, -bound, bound)
    pe = sinusoidal_pe(max_len, dim)
    return w, b, pe


# ------------------------------ wrapper -------------------------------------

def patch_embed(x, w, b, pe=None, *, patch_len, stride=None, pos=True,
                compute_dtype=jnp.bfloat16, out_dtype=None,
                target_out_block_bytes=2 << 20, vmem_budget_bytes=12 << 20):
    """Fused PatchEmbed forward.

    x  : (B, L) float32 -- TimeFilter feeds the flattened (B, C*T) series here
    w  : (patch_len, D) -- nn.Linear weight transposed to (in, out)
    b  : (D,)
    pe : (>=N, D)       -- sinusoidal table; rows [0, N) are used
    returns (B, N, D) with N = (L - patch_len) // stride + 1, dtype = out_dtype (default x.dtype).
    """
    stride = patch_len if stride is None else stride
    B, L = x.shape
    P = patch_len
    D = w.shape[1]
    N = (L - P) // stride + 1
    compute_dtype = np.dtype(compute_dtype)
    out_dtype = x.dtype if out_dtype is None else np.dtype(out_dtype)

    if pos:
        if pe is None:
            raise ValueError("pos=True requires a positional-embedding table")
        if pe.shape[0] < N:
            raise ValueError(f"PE table has {pe.shape[0]} rows; need >= {N}")

    # ---- unfold: free metadata reshape for the non-overlapping TimeFilter setting ----
    if stride == P and N * P == L:
        patches = x.reshape(B * N, P)
    else:
        # general unfold (overlapping / gapped): one XLA gather in the wrapper
        idx = jnp.arange(N)[:, None] * stride + jnp.arange(P)[None, :]
        patches = x[:, idx].reshape(B * N, P)

    # ---- bf16 fast path: shrink the operand streams, keep f32 MXU accumulation ----
    patches = patches.astype(compute_dtype)
    w_c = w.astype(compute_dtype)

    # ---- pad D to a multiple of 128: unmasked lane-dense stores on the output stream ----
    Dp = max(128, _round_up(D, 128))
    if Dp != D:
        w_c = jnp.pad(w_c, ((0, 0), (0, Dp - D)))
        b_p = jnp.pad(b, (0, Dp - D))
        pe_p = jnp.pad(pe[:N], ((0, 0), (0, Dp - D))) if pos else None
    else:
        b_p = b
        pe_p = pe[:N] if pos else None

    # ---- (N, Dp) f32 additive table = bias (+ PE); added to the f32 accumulator in-kernel ----
    if pos:
        table = (pe_p + b_p[None, :]).astype(jnp.float32)
    else:
        table = jnp.broadcast_to(b_p[None, :], (N, Dp)).astype(jnp.float32)

    # ---- row tiling over the flattened (B*N) patch axis ----
    total_rows = B * N
    min_item = min(compute_dtype.itemsize, out_dtype.itemsize)
    sublane = 8 * (4 // min_item)                     # 8 (f32) / 16 (bf16) / 32 (8-bit)
    row_align = sublane * N // math.gcd(sublane, N)   # lcm: PE-aligned block starts, dense sublanes
    # VMEM math: the (TM, P) x block is lane-padded to ceil(P/128)*128 lanes in VMEM.
    x_row_bytes = _round_up(P, 128) * compute_dtype.itemsize
    out_row_bytes = Dp * out_dtype.itemsize
    acc_row_bytes = Dp * 4                            # f32 matmul intermediate
    resident = 2 * (N * Dp * 4 + _round_up(P, sublane) * Dp * compute_dtype.itemsize)
    budget = max(vmem_budget_bytes - resident, 1 << 20)
    TM = _choose_tm(total_rows, row_align, x_row_bytes, out_row_bytes, acc_row_bytes,
                    target_out_block_bytes, budget)
    grid = (pl.cdiv(total_rows, TM),)

    # In-kernel broadcast of the (N, Dp) table needs N % 8 == 0 for a free reshape;
    # otherwise fall back to tiling it to (TM, Dp) on the host (still batch-independent).
    if N % 8 == 0:
        rows_per_batch = N
        table_arr, t_block = table, (N, Dp)
    else:
        rows_per_batch = None
        table_arr, t_block = jnp.tile(table, (TM // N, 1)), (TM, Dp)

    kernel = functools.partial(_patch_embed_kernel, rows_per_batch=rows_per_batch)

    out = pl.pallas_call(
        kernel,
        grid=grid,
        in_specs=[
            pl.BlockSpec((TM, P), lambda i: (i, 0)),
            pl.BlockSpec((P, Dp), lambda i: (0, 0)),   # resident (constant index map)
            pl.BlockSpec(t_block, lambda i: (0, 0)),   # resident (constant index map)
        ],
        # (optional) sweep pipeline_mode=pl.Buffered(3) here if a profile ever shows
        # exposed output writeback between short steps.
        out_specs=pl.BlockSpec((TM, Dp), lambda i: (i, 0)),
        out_shape=jax.ShapeDtypeStruct((total_rows, Dp), out_dtype),
        compiler_params=pltpu.CompilerParams(
            # single memory-bound row axis; "parallel" lets Mosaic shard grid steps across
            # both TensorCores on v7x (no-op on single-TC v5e/v6e).
            dimension_semantics=("parallel",),
        ),
    )(patches, w_c, table_arr)

    if Dp != D:
        out = out[:, :D]
    return out.reshape(B, N, D)


# --------------------------------- main -------------------------------------

if __name__ == "__main__":
    # TimeFilter-style usage: PatchEmbed sees the flattened (B, C*T) series.
    B, C, T = 4, 4, 16
    L = C * T                      # 64
    patch_len = 8                  # stride defaults to patch_len (as in TimeFilter)
    dim = 32
    N = L // patch_len             # 8 patches

    key = jax.random.PRNGKey(0)
    kx, kp = jax.random.split(key)
    x = jax.random.normal(kx, (B, L), jnp.float32)
    w, b, pe = init_patch_embed(kp, patch_len, dim, max_len=N)

    # pure-jnp reference of the PyTorch forward: unfold -> linear -> + PE
    ref = jnp.matmul(x.reshape(B, N, patch_len), w) + b[None, None, :] + pe[:N][None, :, :]

    # 1) exact path: f32 operands / f32 output (matches the PyTorch module numerics)
    fwd_f32 = jax.jit(functools.partial(
        patch_embed, patch_len=patch_len,
        compute_dtype=jnp.float32, out_dtype=jnp.float32))
    y32 = fwd_f32(x, w, b, pe)
    jax.block_until_ready(y32)
    assert y32.shape == (B, N, dim), y32.shape
    assert bool(jnp.all(jnp.isfinite(y32)))
    assert bool(jnp.allclose(y32, ref, atol=1e-5, rtol=1e-5)), \
        float(jnp.max(jnp.abs(y32 - ref)))

    # 2) bandwidth-optimized path (perf review): bf16 operands + bf16 output, f32 accumulation
    fwd_bf16 = jax.jit(functools.partial(
        patch_embed, patch_len=patch_len,
        compute_dtype=jnp.bfloat16, out_dtype=jnp.bfloat16))
    y16 = fwd_bf16(x, w, b, pe)
    jax.block_until_ready(y16)
    assert y16.shape == (B, N, dim), y16.shape
    assert y16.dtype == jnp.bfloat16
    assert bool(jnp.allclose(y16.astype(jnp.float32), ref, atol=8e-2, rtol=3e-2)), \
        float(jnp.max(jnp.abs(y16.astype(jnp.float32) - ref)))

    print("KERNEL_OK")
</pallas_src>

<mosaic_0001>
module attributes {stable_mosaic.version = 11 : i64} {
  func.func @_patch_embed_kernel(%arg0: i32, %arg1: memref<16x8xf32, #tpu.memory_space<vmem>>, %arg2: memref<8x128xf32, #tpu.memory_space<vmem>>, %arg3: memref<8x128xf32, #tpu.memory_space<vmem>>, %arg4: memref<16x128xf32, #tpu.memory_space<vmem>>) attributes {dimension_semantics = [#tpu.dimension_semantics<parallel>], iteration_bounds = array<i64: 2>, scalar_prefetch = 0 : i64, scratch_operands = 0 : i64, tpu.core_type = #tpu.core_type<tc>, window_params = [{transform_indices = @transform_0, window_bounds = array<i64: 16, 8>}, {pipeline_mode = #tpu.pipeline_mode<synchronous>, transform_indices = @transform_1, window_bounds = array<i64: 8, 128>}, {pipeline_mode = #tpu.pipeline_mode<synchronous>, transform_indices = @transform_2, window_bounds = array<i64: 8, 128>}, {transform_indices = @transform_3, window_bounds = array<i64: 16, 128>}]} {
    %c0 = arith.constant 0 : index
    %c0_0 = arith.constant 0 : index
    %0 = vector.load %arg1[%c0, %c0_0] : memref<16x8xf32, #tpu.memory_space<vmem>>, vector<16x8xf32>
    %c0_1 = arith.constant 0 : index
    %c0_2 = arith.constant 0 : index
    %1 = vector.load %arg2[%c0_1, %c0_2] : memref<8x128xf32, #tpu.memory_space<vmem>>, vector<8x128xf32>
    %cst = arith.constant dense<0.000000e+00> : vector<16x128xf32>
    %2 = tpu.matmul %0, %1, %cst {dimension_numbers = #tpu.dot_dimension_numbers<[1], [0], [0], [1], [0, 0, 1, 1], [], []>} : vector<16x8xf32>, vector<8x128xf32>, vector<16x128xf32> -> vector<16x128xf32>
    %c0_3 = arith.constant 0 : index
    %c0_4 = arith.constant 0 : index
    %3 = vector.load %arg3[%c0_3, %c0_4] : memref<8x128xf32, #tpu.memory_space<vmem>>, vector<8x128xf32>
    %4 = vector.shape_cast %2 : vector<16x128xf32> to vector<2x8x128xf32>
    %5 = vector.shape_cast %3 : vector<8x128xf32> to vector<1x8x128xf32>
    %6 = vector.broadcast %5 : vector<1x8x128xf32> to vector<2x8x128xf32>
    %7 = arith.addf %4, %6 : vector<2x8x128xf32>
    %8 = vector.shape_cast %7 : vector<2x8x128xf32> to vector<16x128xf32>
    %c0_5 = arith.constant 0 : index
    %c0_6 = arith.constant 0 : index
    %9 = vector.load %arg4[%c0_5, %c0_6] : memref<16x128xf32, #tpu.memory_space<vmem>>, vector<16x128xf32>
    tpu.vector_store %arg4[%c0_5, %c0_6], %8 {strides = array<i32>} : memref<16x128xf32, #tpu.memory_space<vmem>>, vector<16x128xf32>,
    return
  }
  func.func @transform_0(%arg0: i32) -> (i32, i32) {
    %c0_i32 = arith.constant 0 : i32
    %c0_i32_0 = arith.constant 0 : i32
    return %arg0, %c0_i32 : i32, i32
  }
  func.func @transform_1(%arg0: i32) -> (i32, i32) {
    %c0_i32 = arith.constant 0 : i32
    %c0_i32_0 = arith.constant 0 : i32
    %c0_i32_1 = arith.constant 0 : i32
    return %c0_i32, %c0_i32_0 : i32, i32
  }
  func.func @transform_2(%arg0: i32) -> (i32, i32) {
    %c0_i32 = arith.constant 0 : i32
    %c0_i32_0 = arith.constant 0 : i32
    %c0_i32_1 = arith.constant 0 : i32
    return %c0_i32, %c0_i32_0 : i32, i32
  }
  func.func @transform_3(%arg0: i32) -> (i32, i32) {
    %c0_i32 = arith.constant 0 : i32
    %c0_i32_0 = arith.constant 0 : i32
    return %arg0, %c0_i32 : i32, i32
  }
}

</mosaic_0001>

<llo_original>
// kernel: patch_embed.1
$region0: #{patch_embed.1}
  #allocation0 [shape = 'u32[]', space=smem, size = 0x4, offset = 0x4, fixed_abs, tag = 'smem constant byte address 0x4 - core index']
  #allocation1 [shape = 'u32[144,128]{1,0:T(1,128)}', space=vmem, size = 0x12000, scoped, tag = 'internal scratch']
  %s0 = inlined_call_operand.vmem [shape: f32[32,8], index: 0, kind: input, shape index: {}]
  %s1 = inlined_call_operand.vmem [shape: f32[8,128], index: 1, kind: input, shape index: {}]
  %s2 = inlined_call_operand.vmem [shape: f32[8,128], index: 2, kind: input, shape index: {}]
  %s3 = inlined_call_operand.vmem [shape: f32[32,128], index: 3, kind: output, shape index: {}]
  %s4 = sld [smem:[#allocation0]]
  $region45: #{patch_embed.1} parent=0
    _
  %s6 = ssub.s32 1, %s4
  %s7 = scalar_select 0, %s6, %s4
  loop: start=0, step=1, limit=4
  $region2: #{patch_embed.1} parent=0 // loop_pre_header
    _
  $region3: #{patch_embed.1} parent=0 // loop_header
    %s9 = sphi 0, %s13
    %p10 = scmp.ge.s32.totalorder %s9, 4
    %s19 = sphi 0, %s21
    %s22 = sphi 0, %s19
    %s23 = sphi 0, %s22
    %s39 = sphi 0, %s23
    %s43 = sphi 0, %s43
    %s45 = sphi 0, %s43
    %s46 = sphi 0, %s45
    %s60 = sphi 0, %s46
    %s64 = sphi 0, %s64
    %s66 = sphi 0, %s64
    %s67 = sphi 0, %s66
    %s81 = sphi 0, %s67
    %s87 = sphi 0, %s89
    %s90 = sphi 0, %s87
    %s91 = sphi 0, %s90
    %s107 = sphi 0, %s91
  $region4: #{patch_embed.1} parent=0 // loop_header_branch
    %12 = sbr.rel (%p10) target = $region8
  $region5: #{patch_embed.1} parent=0 // loop_body
    %s14 = ssub.s32 %s9, 1
    %s15 = ssub.s32 %s9, 2
    %s16 = sadd.s32 %s9, 1
    %s17 = ssub.s32 %s9, %s16
    %p18 = scmp.eq.s32.totalorder %s17, 0
    %s20 = sadd.s32 %s19, 1
    %s21 = scalar_select %p18, %s19, %s20
    %p24 = pneg %p18
    %p25 = scmp.eq.s32.totalorder %s9, 1
    %p26 = por %p24, %p25
    %p27 = scmp.ne.s32.totalorder %s19, %s22
    %p28 = scmp.eq.s32.totalorder %s9, 0
    %p29 = por %p27, %p28
    %p30 = scmp.ne.s32.totalorder %s19, %s22
    %p31 = scmp.eq.s32.totalorder %s14, 1
    %p32 = por %p30, %p31
    %p33 = scmp.ne.s32.totalorder %s22, %s23
    %p34 = scmp.eq.s32.totalorder %s14, 0
    %p35 = por %p33, %p34
    %p36 = scmp.ne.s32.totalorder %s22, %s23
    %p37 = scmp.eq.s32.totalorder %s15, 1
    %p38 = por %p36, %p37
    %p40 = scmp.ne.s32.totalorder %s23, %s39
    %p41 = scmp.eq.s32.totalorder %s15, 0
    %p42 = por %p40, %p41
    %s44 = sadd.s32 %s43, 1
    %p47 = scmp.eq.s32.totalorder %s9, 1
    %p48 = scmp.ne.s32.totalorder %s43, %s45
    %p49 = scmp.eq.s32.totalorder %s9, 0
    %p50 = por %p48, %p49
    %p51 = scmp.ne.s32.totalorder %s43, %s45
    %p52 = scmp.eq.s32.totalorder %s14, 1
    %p53 = por %p51, %p52
    %p54 = scmp.ne.s32.totalorder %s45, %s46
    %p55 = scmp.eq.s32.totalorder %s14, 0
    %p56 = por %p54, %p55
    %p57 = scmp.ne.s32.totalorder %s45, %s46
    %p58 = scmp.eq.s32.totalorder %s15, 1
    %p59 = por %p57, %p58
    %p61 = scmp.ne.s32.totalorder %s46, %s60
    %p62 = scmp.eq.s32.totalorder %s15, 0
    %p63 = por %p61, %p62
    %s65 = sadd.s32 %s64, 1
    %p68 = scmp.eq.s32.totalorder %s9, 1
    %p69 = scmp.ne.s32.totalorder %s64, %s66
    %p70 = scmp.eq.s32.totalorder %s9, 0
    %p71 = por %p69, %p70
    %p72 = scmp.ne.s32.totalorder %s64, %s66
    %p73 = scmp.eq.s32.totalorder %s14, 1
    %p74 = por %p72, %p73
    %p75 = scmp.ne.s32.totalorder %s66, %s67
    %p76 = scmp.eq.s32.totalorder %s14, 0
    %p77 = por %p75, %p76
    %p78 = scmp.ne.s32.totalorder %s66, %s67
    %p79 = scmp.eq.s32.totalorder %s15, 1
    %p80 = por %p78, %p79
    %p82 = scmp.ne.s32.totalorder %s67, %s81
    %p83 = scmp.eq.s32.totalorder %s15, 0
    %p84 = por %p82, %p83
    %s85 = ssub.s32 %s9, %s16
    %p86 = scmp.eq.s32.totalorder %s85, 0
    %s88 = sadd.s32 %s87, 1
    %s89 = scalar_select %p86, %s87, %s88
    %p92 = pneg %p86
    %p93 = scmp.eq.s32.totalorder %s9, 1
    %p94 = por %p92, %p93
    %p95 = scmp.ne.s32.totalorder %s87, %s90
    %p96 = scmp.eq.s32.totalorder %s9, 0
    %p97 = por %p95, %p96
    %p98 = scmp.ne.s32.totalorder %s87, %s90
    %p99 = scmp.eq.s32.totalorder %s14, 1
    %p100 = por %p98, %p99
    %p101 = scmp.ne.s32.totalorder %s90, %s91
    %p102 = scmp.eq.s32.totalorder %s14, 0
    %p103 = por %p101, %p102
    %p104 = scmp.ne.s32.totalorder %s90, %s91
    %p105 = scmp.eq.s32.totalorder %s15, 1
    %p106 = por %p104, %p105
    %p108 = scmp.ne.s32.totalorder %s91, %s107
    %p109 = scmp.eq.s32.totalorder %s15, 0
    %p110 = por %p108, %p109
    %p111 = scmp.le.s32.totalorder 1, %s9
    %p112 = scmp.lt.s32.totalorder %s9, 3
    %p113 = pnand %p111, %p112
    %p114 = pneg %p113
    // Predicated region
    $region9: #{patch_embed.1} parent=5 // pred_check
      _
    $region10: #{patch_embed.1} parent=5 // pred_check_branch
      %116 = sbr.rel (%p113) target = $region12
    $region11: #{patch_embed.1} parent=5 // pred_region
      %s117 = ssub.s32 %s9, 1
      // Predicated region
      $region13: #{patch_embed.1} parent=11 // pred_check
        %p118 = pneg %p56
      $region14: #{patch_embed.1} parent=11 // pred_check_branch
        %120 = sbr.rel (%p118) target = $region16
      $region15: #{patch_embed.1} parent=11 // pred_region
        _
      $region16: #{patch_embed.1} parent=11 // pred_fallthru
        _
      // Predicated region
      $region17: #{patch_embed.1} parent=11 // pred_check
        %p121 = pneg %p77
      $region18: #{patch_embed.1} parent=11 // pred_check_branch
        %123 = sbr.rel (%p121) target = $region20
      $region19: #{patch_embed.1} parent=11 // pred_region
        _
      $region20: #{patch_embed.1} parent=11 // pred_fallthru
        _
    $region12: #{patch_embed.1} parent=5 // pred_fallthru
      _
    %p124 = scmp.lt.s32.totalorder %s9, 2
    // Predicated region
    $region21: #{patch_embed.1} parent=5 // pred_check
      %p125 = pneg %p124
    $region22: #{patch_embed.1} parent=5 // pred_check_branch
      %127 = sbr.rel (%p125) target = $region24
    $region23: #{patch_embed.1} parent=5 // pred_region
      // Predicated region
      $region25: #{patch_embed.1} parent=23 // pred_check
        %p128 = pneg %p29
      $region26: #{patch_embed.1} parent=23 // pred_check_branch
        %130 = sbr.rel (%p128) target = $region28
      $region27: #{patch_embed.1} parent=23 // pred_region
        %s131 = smul.u32 2, %s9
        %p132 = scmp.lt.s32.totalorder %s131, 3
        %s133 = scalar_select %p132, %s131, 3
        %s134 = smul.addr %s133, 8
        %s135 = scalar_lea.vmem %s0, %s134
        %s136 = smul.u32 2, %s9
      $region28: #{patch_embed.1} parent=23 // pred_fallthru
        _
    $region24: #{patch_embed.1} parent=5 // pred_fallthru
      _
    %p137 = scmp.le.s32.totalorder 1, %s9
    %p138 = scmp.lt.s32.totalorder %s9, 3
    %p139 = pnand %p137, %p138
    %p140 = pneg %p139
    // Predicated region
    $region29: #{patch_embed.1} parent=5 // pred_check
      _
    $region30: #{patch_embed.1} parent=5 // pred_check_branch
      %142 = sbr.rel (%p139) target = $region32
    $region31: #{patch_embed.1} parent=5 // pred_region
      %s143 = ssub.s32 %s9, 1
      %s144 = smul.u32 2, %s14
      %p145 = scmp.lt.s32.totalorder %s144, 3
      %s146 = scalar_select %p145, %s144, 3
      %s147 = smul.addr %s146, 8
      %s148 = scalar_lea.vmem %s0, %s147
      %p149 = pneg %p35
      %p150 = pneg %p32
      %p151 = pneg %p56
      %p152 = pneg %p53
      %p153 = pneg %p77
      %p154 = pneg %p74
      %p155 = pneg %p103
      %p156 = pneg %p100
      %s157 = smul.u32 2, %s14
      %p158 = scmp.lt.s32.totalorder %s157, 3
      %s159 = scalar_select %p158, %s157, 3
      %s160 = smul.addr %s159, 8
      %s161 = scalar_lea.vmem %s3, %s160
      %s162 = smul.u32 2, %s14
      %p163 = scmp.lt.s32.totalorder %s162, 3
      %s164 = scalar_select %p163, %s162, 3
      %s165 = smul.addr %s164, 8
      %s166 = scalar_lea.vmem %s0, %s165
      %s167 = smul.u32 2, %s14
      %s168 = smul.u32 2, %s14
      %p169 = scmp.lt.s32.totalorder %s168, 3
      %s170 = scalar_select %p169, %s168, 3
      %s171 = smul.addr %s170, 8
      %s172 = scalar_lea.vmem %s3, %s171
      %s173 = smul.u32 2, %s14
      %v174 = vld [vmem:[%s166] sm:$0xff]
      %v175 = vld [vmem:[%s166 + $0x8] sm:$0xff]
      %v176 = vld [vmem:[%s1] sm:$0xff]
      %vm177 = vcmask 64512
      %v179 = vsel %vm177, %v174, 0
      %v182 = vsel %vm177, %v175, 0
      %184 = vmatprep.subr.mxu0 0.0
      %185 = vmatpush1.msra.mxu0 0.0
      %186 = vmatprep.subr.mxu0 0.0
      %187 = vmatpush1.msra.mxu0 0.0
      %188 = vmatprep.subr.mxu0 0.0
      %189 = vmatpush1.msra.mxu0 0.0
      %190 = vmatprep.subr.mxu0 0.0
      %191 = vmatpush1.msra.mxu0 0.0
      %192 = vmatprep.subr.mxu0 0.0
      %193 = vmatpush1.msra.mxu0 0.0
      %194 = vmatprep.subr.mxu0 0.0
      %195 = vmatpush1.msra.mxu0 0.0
      %196 = vmatprep.subr.mxu0 0.0
      %197 = vmatpush1.msra.mxu0 0.0
      %198 = vmatprep.subr.mxu0 0.0
      %199 = vmatpush1.msra.mxu0 0.0
      %200 = vmatprep.subr.mxu0 0.0
      %201 = vmatpush1.msra.mxu0 0.0
      %202 = vmatprep.subr.mxu0 0.0
      %203 = vmatpush1.msra.mxu0 0.0
      %204 = vmatprep.subr.mxu0 0.0
      %205 = vmatpush1.msra.mxu0 0.0
      %206 = vmatprep.subr.mxu0 0.0
      %207 = vmatpush1.msra.mxu0 0.0
      %208 = vmatprep.subr.mxu0 0.0
      %209 = vmatpush1.msra.mxu0 0.0
      %210 = vmatprep.subr.mxu0 0.0
      %211 = vmatpush1.msra.mxu0 0.0
      %212 = vmatprep.subr.mxu0 0.0
      %213 = vmatpush1.msra.mxu0 0.0
      %214 = vmatprep.subr.mxu0 0.0
      %215 = vmatpush1.msra.mxu0 %v176
      %216 = vmatprep.subr.mxu0 0.0
      %217 = vmatpush2.msra.mxu0 0.0
      %218 = vmatprep.subr.mxu0 0.0
      %219 = vmatpush2.msra.mxu0 0.0
      %220 = vmatprep.subr.mxu0 0.0
      %221 = vmatpush2.msra.mxu0 0.0
      %222 = vmatprep.subr.mxu0 0.0
      %223 = vmatpush2.msra.mxu0 0.0
      %224 = vmatprep.subr.mxu0 0.0
      %225 = vmatpush2.msra.mxu0 0.0
      %226 = vmatprep.subr.mxu0 0.0
      %227 = vmatpush2.msra.mxu0 0.0
      %228 = vmatprep.subr.mxu0 0.0
      %229 = vmatpush2.msra.mxu0 0.0
      %230 = vmatprep.subr.mxu0 0.0
      %231 = vmatpush2.msra.mxu0 0.0
      %232 = vmatprep.subr.mxu0 0.0
      %233 = vmatpush2.msra.mxu0 0.0
      %234 = vmatprep.subr.mxu0 0.0
      %235 = vmatpush2.msra.mxu0 0.0
      %236 = vmatprep.subr.mxu0 0.0
      %237 = vmatpush2.msra.mxu0 0.0
      %238 = vmatprep.subr.mxu0 0.0
      %239 = vmatpush2.msra.mxu0 0.0
      %240 = vmatprep.subr.mxu0 0.0
      %241 = vmatpush2.msra.mxu0 0.0
      %242 = vmatprep.subr.mxu0 0.0
      %243 = vmatpush2.msra.mxu0 0.0
      %244 = vmatprep.subr.mxu0 0.0
      %245 = vmatpush2.msra.mxu0 0.0
      %246 = vmatprep.subr.mxu0 0.0
      %247 = vmatpush2.msra.mxu0 0.0
      %248 = vmatprep.mubr.f32.mxu0 0.0
      %249 = vmatmul.mubr.f32.gmra.mxu0 %v179
      %v250 = vpop.f32.mrf.mxu0
      %v251 = vadd.f32 0.0, %v250
      %v252 = vpop.f32.mrf.mxu0
      %253 = vmatprep.mubr.f32.mxu0 0.0
      %254 = vmatmul.mubr.f32.gmra.mxu0 %v182
      %v255 = vpop.f32.mrf.mxu0
      %v256 = vadd.f32 0.0, %v255
      %v257 = vpop.f32.mrf.mxu0
      %258 = vdwg.mxu0
      %v259 = vld [vmem:[%s2] sm:$0xff]
      %v260 = vadd.f32 %v251, %v259
      %v261 = vadd.f32 %v256, %v259
      %262 = vst [vmem:[%s172] sm:$0xff] %v260
      %263 = vst [vmem:[%s172 + $0x8] sm:$0xff] %v261
      %s264 = smul.u32 2, %s14
      %p265 = scmp.lt.s32.totalorder %s264, 3
      %s266 = scalar_select %p265, %s264, 3
      %s267 = smul.addr %s266, 8
      %s268 = scalar_lea.vmem %s3, %s267
      // Predicated region
      $region33: #{patch_embed.1} parent=31 // pred_check
        %p269 = pneg %p100
      $region34: #{patch_embed.1} parent=31 // pred_check_branch
        %271 = sbr.rel (%p269) target = $region36
      $region35: #{patch_embed.1} parent=31 // pred_region
        %s272 = smul.u32 2, %s14
      $region36: #{patch_embed.1} parent=31 // pred_fallthru
        _
    $region32: #{patch_embed.1} parent=5 // pred_fallthru
      _
    %p273 = scmp.le.s32.totalorder 2, %s9
    // Predicated region
    $region37: #{patch_embed.1} parent=5 // pred_check
      %p274 = pneg %p273
    $region38: #{patch_embed.1} parent=5 // pred_check_branch
      %276 = sbr.rel (%p274) target = $region40
    $region39: #{patch_embed.1} parent=5 // pred_region
      %s277 = ssub.s32 %s9, 2
      // Predicated region
      $region41: #{patch_embed.1} parent=39 // pred_check
        %p278 = pneg %p106
      $region42: #{patch_embed.1} parent=39 // pred_check_branch
        %280 = sbr.rel (%p278) target = $region44
      $region43: #{patch_embed.1} parent=39 // pred_region
        %s281 = smul.u32 2, %s15
        %p282 = scmp.lt.s32.totalorder %s281, 3
        %s283 = scalar_select %p282, %s281, 3
        %s284 = smul.addr %s283, 8
        %s285 = scalar_lea.vmem %s3, %s284
      $region44: #{patch_embed.1} parent=39 // pred_fallthru
        _
    $region40: #{patch_embed.1} parent=5 // pred_fallthru
      _
  $region6: #{patch_embed.1} parent=0 // loop_footer
    %s13 = sadd.s32 1, %s9
  $region7: #{patch_embed.1} parent=0 // loop_footer_branch
    %8 = sbr.rel target = $region3
  $region8: #{patch_embed.1} parent=0 // loop_exit
    _

</llo_original>
